<compile_context>
chip_gen: v7x
topology: tpu7x:2x2x1
jax: 0.10.0
libtpu: 0.0.40
codegen_flags: <defaults>
</compile_context>

<pallas_src>
import jax
import jax.numpy as jnp
from jax.experimental import pallas as pl
from jax.experimental.pallas import tpu as pltpu


def _make_kernel(num_layers: int, hidden: int):
    num_rest = num_layers - 1

    def kernel(*refs):
        # refs: x, hflat, whh_bd, b_packed, perm, wih0, wih_1..wih_{L-1}, out
        x_ref, hflat_ref, whh_ref, b_ref, perm_ref, wih0_ref = refs[:6]
        wih_rest = refs[6:6 + num_rest]
        out_ref = refs[6 + num_rest]

        # ---- Hidden path for ALL layers in one MXU push against the permuted
        #      block-diagonal W_hh; the state is consumed in native (B, H*L) order,
        #      so no per-call transpose is needed anywhere.
        #      r[:, l*H:(l+1)*H] = h_prev_l @ W_hh_l^T + (b_ih_l + b_hh_l)
        r = (
            jnp.dot(hflat_ref[...], whh_ref[...], preferred_element_type=jnp.float32)
            + b_ref[...]
        )  # (B, L*H), layer-major

        # ---- Serial chain: exactly one matmul + one add + tanh per layer.
        h = jnp.tanh(
            jnp.dot(x_ref[...], wih0_ref[...], preferred_element_type=jnp.float32)
            + r[:, 0:hidden]
        )
        hs = [h]
        for i in range(1, num_layers):
            h = jnp.tanh(
                jnp.dot(h, wih_rest[i - 1][...], preferred_element_type=jnp.float32)
                + r[:, i * hidden:(i + 1) * hidden]
            )
            hs.append(h)

        packed = jnp.concatenate(hs, axis=-1) if num_layers > 1 else hs[0]  # (B, L*H)

        # ---- Interleave layers into the module's (B, H, L) memory order on the MXU
        #      (perm is a constant 0/1 matrix), so the wrapper reshape is free and the
        #      store is a single lane-dense slab.
        out_ref[...] = jnp.dot(
            packed, perm_ref[...], preferred_element_type=jnp.float32
        ).astype(out_ref.dtype)

    return kernel


def prepare_params(w_ih0, w_ih_rest, w_hh, b_ih, b_hh):
    """One-time parameter preparation (hoisted out of the per-call path).

    w_ih0     : (H, In)      layer-0 input-to-hidden weight
    w_ih_rest : (L-1, H, H)  layers 1..L-1 input-to-hidden weights (may be empty)
    w_hh      : (L, H, H)    hidden-to-hidden weights
    b_ih,b_hh : (L, H)

    Returns:
      wih0_t     : (In, H)
      wih_rest_t : tuple of (H, H), one per layer >= 1  (empty tuple when L == 1)
      whh_bd     : (H*L, L*H) permuted block-diagonal so that
                   (h0.reshape(B, H*L) @ whh_bd)[:, l*H+j] == (h_prev_l @ W_hh_l^T)[:, j]
      b_packed   : (1, L*H)   pre-summed biases, layer-major
      perm       : (L*H, H*L) 0/1 permutation: layer-major -> (H, L)-interleaved
    """
    L, H, _ = w_hh.shape
    dt = w_hh.dtype

    wih0_t = jnp.transpose(w_ih0, (1, 0))                       # (In, H)
    wih_rest_t = tuple(jnp.transpose(w_ih_rest[i], (1, 0)) for i in range(L - 1))

    # whh_bd[k*L + l, m*H + j] = W_hh[l, j, k] * (l == m)
    eye_l = jnp.eye(L, dtype=dt)
    whh_bd = jnp.einsum("ljk,lm->klmj", w_hh, eye_l).reshape(H * L, L * H)

    b_packed = (b_ih + b_hh).reshape(1, L * H)                  # (1, L*H)

    # perm[l*H + j, k*L + m] = (j == k) * (l == m)
    perm = jnp.einsum(
        "jk,lm->ljkm", jnp.eye(H, dtype=dt), jnp.eye(L, dtype=dt)
    ).reshape(L * H, H * L)

    return wih0_t, wih_rest_t, whh_bd, b_packed, perm


@jax.jit
def multilayer_rnn_cell(x, prev, params):
    """Forward pass matching MultiLayerRNNCell.forward.

    x      : (B, In)
    prev   : tuple (h0, c0), each (B, H, L)   (c0 is unused, as in the PyTorch module)
    params : output of prepare_params
    returns (next_hidden, zeros_like(next_hidden)), next_hidden: (B, H, L)
    """
    wih0_t, wih_rest_t, whh_bd, b_packed, perm = params
    h0 = prev[0]
    B, H, L = h0.shape

    # Free contiguous view (no data movement): (B, H, L) -> (B, H*L).
    hflat = h0.reshape(B, H * L)
    out_dtype = jnp.result_type(x.dtype, h0.dtype)

    num_inputs = 6 + (L - 1)
    out_flat = pl.pallas_call(
        _make_kernel(L, H),
        out_shape=jax.ShapeDtypeStruct((B, H * L), out_dtype),
        in_specs=[pl.BlockSpec(memory_space=pltpu.MemorySpace.VMEM)] * num_inputs,
        out_specs=pl.BlockSpec(memory_space=pltpu.MemorySpace.VMEM),
    )(x, hflat, whh_bd, b_packed, perm, wih0_t, *wih_rest_t)

    # Kernel already wrote (H, L)-interleaved data; this reshape is a free view.
    next_hidden = out_flat.reshape(B, H, L)
    return next_hidden, jnp.zeros_like(next_hidden)


def _reference(x, prev, w_ih0, w_ih_rest, w_hh, b_ih, b_hh):
    """Pure-JAX reference mirroring the PyTorch loop, for correctness checking."""
    h0 = prev[0]
    L = h0.shape[2]
    outs = []
    cur = x
    for i in range(L):
        w_in = w_ih0 if i == 0 else w_ih_rest[i - 1]
        h_prev_i = h0[:, :, i]
        h_new = jnp.tanh(cur @ w_in.T + b_ih[i] + h_prev_i @ w_hh[i].T + b_hh[i])
        outs.append(h_new)
        cur = h_new
    nh = jnp.transpose(jnp.stack(outs), (1, 2, 0))
    return nh, jnp.zeros_like(nh)


if __name__ == "__main__":
    # Small, deterministic problem: batch=2, input_size=16, hidden=32, num_layers=3.
    B, IN, H, L = 2, 16, 32, 3

    key = jax.random.PRNGKey(0)
    ks = jax.random.split(key, 8)
    stdv = 1.0 / jnp.sqrt(jnp.float32(H))  # PyTorch nn.RNNCell default init range

    w_ih0 = jax.random.uniform(ks[0], (H, IN), jnp.float32, -stdv, stdv)
    w_ih_rest = jax.random.uniform(ks[1], (L - 1, H, H), jnp.float32, -stdv, stdv)
    w_hh = jax.random.uniform(ks[2], (L, H, H), jnp.float32, -stdv, stdv)
    b_ih = jax.random.uniform(ks[3], (L, H), jnp.float32, -stdv, stdv)
    b_hh = jax.random.uniform(ks[4], (L, H), jnp.float32, -stdv, stdv)

    x = jax.random.normal(ks[5], (B, IN), jnp.float32)
    h0 = jax.random.normal(ks[6], (B, H, L), jnp.float32)
    c0 = jax.random.normal(ks[7], (B, H, L), jnp.float32)  # unused by forward (matches PyTorch)

    # One-time parameter prep (not part of the per-call path).
    params = jax.block_until_ready(prepare_params(w_ih0, w_ih_rest, w_hh, b_ih, b_hh))

    nh, nc = multilayer_rnn_cell(x, (h0, c0), params)
    nh = jax.block_until_ready(nh)
    nc = jax.block_until_ready(nc)

    ref_nh, ref_nc = _reference(x, (h0, c0), w_ih0, w_ih_rest, w_hh, b_ih, b_hh)
    assert nh.shape == (B, H, L) and nc.shape == (B, H, L)
    assert jnp.allclose(nh, ref_nh, atol=1e-5, rtol=1e-5)
    assert jnp.all(nc == 0)

    # Regression check for the previously flagged L == 1 edge case (no zero-sized
    # weight array is routed through pallas_call anymore).
    L1 = 1
    w_hh1 = w_hh[:L1]
    b_ih1, b_hh1 = b_ih[:L1], b_hh[:L1]
    w_ih_rest1 = w_ih_rest[:0]  # empty (0, H, H): only iterated over, never passed to the kernel
    h0_1, c0_1 = h0[:, :, :L1], c0[:, :, :L1]
    params1 = prepare_params(w_ih0, w_ih_rest1, w_hh1, b_ih1, b_hh1)
    nh1, nc1 = multilayer_rnn_cell(x, (h0_1, c0_1), params1)
    nh1 = jax.block_until_ready(nh1)
    ref_nh1, _ = _reference(x, (h0_1, c0_1), w_ih0, w_ih_rest1, w_hh1, b_ih1, b_hh1)
    assert jnp.allclose(nh1, ref_nh1, atol=1e-5, rtol=1e-5)
    assert jnp.all(nc1 == 0)

    print("KERNEL_OK")
</pallas_src>

<mosaic_0001>
module attributes {stable_mosaic.version = 11 : i64} {
  func.func @kernel(%arg0: memref<2x16xf32, #tpu.memory_space<vmem>>, %arg1: memref<2x96xf32, #tpu.memory_space<vmem>>, %arg2: memref<96x96xf32, #tpu.memory_space<vmem>>, %arg3: memref<1x96xf32, #tpu.memory_space<vmem>>, %arg4: memref<96x96xf32, #tpu.memory_space<vmem>>, %arg5: memref<16x32xf32, #tpu.memory_space<vmem>>, %arg6: memref<32x32xf32, #tpu.memory_space<vmem>>, %arg7: memref<32x32xf32, #tpu.memory_space<vmem>>, %arg8: memref<2x96xf32, #tpu.memory_space<vmem>>) attributes {dimension_semantics = [], scalar_prefetch = 0 : i64, scratch_operands = 0 : i64, tpu.core_type = #tpu.core_type<tc>} {
    %c0 = arith.constant 0 : index
    %c0_0 = arith.constant 0 : index
    %0 = vector.load %arg1[%c0, %c0_0] : memref<2x96xf32, #tpu.memory_space<vmem>>, vector<2x96xf32>
    %c0_1 = arith.constant 0 : index
    %c0_2 = arith.constant 0 : index
    %1 = vector.load %arg2[%c0_1, %c0_2] : memref<96x96xf32, #tpu.memory_space<vmem>>, vector<96x96xf32>
    %cst = arith.constant dense<0.000000e+00> : vector<2x96xf32>
    %2 = tpu.matmul %0, %1, %cst {dimension_numbers = #tpu.dot_dimension_numbers<[1], [0], [0], [1], [0, 0, 1, 1], [], []>} : vector<2x96xf32>, vector<96x96xf32>, vector<2x96xf32> -> vector<2x96xf32>
    %c0_3 = arith.constant 0 : index
    %c0_4 = arith.constant 0 : index
    %3 = vector.load %arg3[%c0_3, %c0_4] : memref<1x96xf32, #tpu.memory_space<vmem>>, vector<1x96xf32>
    %4 = vector.broadcast %3 : vector<1x96xf32> to vector<2x96xf32>
    %5 = arith.addf %2, %4 : vector<2x96xf32>
    %c0_5 = arith.constant 0 : index
    %c0_6 = arith.constant 0 : index
    %6 = vector.load %arg0[%c0_5, %c0_6] : memref<2x16xf32, #tpu.memory_space<vmem>>, vector<2x16xf32>
    %c0_7 = arith.constant 0 : index
    %c0_8 = arith.constant 0 : index
    %7 = vector.load %arg5[%c0_7, %c0_8] : memref<16x32xf32, #tpu.memory_space<vmem>>, vector<16x32xf32>
    %cst_9 = arith.constant dense<0.000000e+00> : vector<2x32xf32>
    %8 = tpu.matmul %6, %7, %cst_9 {dimension_numbers = #tpu.dot_dimension_numbers<[1], [0], [0], [1], [0, 0, 1, 1], [], []>} : vector<2x16xf32>, vector<16x32xf32>, vector<2x32xf32> -> vector<2x32xf32>
    %9 = vector.extract_strided_slice %5 {offsets = [0, 0], sizes = [2, 32], strides = [1, 1]} : vector<2x96xf32> to vector<2x32xf32>
    %10 = arith.addf %8, %9 : vector<2x32xf32>
    %11 = math.tanh %10 : vector<2x32xf32>
    %c0_10 = arith.constant 0 : index
    %c0_11 = arith.constant 0 : index
    %12 = vector.load %arg6[%c0_10, %c0_11] : memref<32x32xf32, #tpu.memory_space<vmem>>, vector<32x32xf32>
    %cst_12 = arith.constant dense<0.000000e+00> : vector<2x32xf32>
    %13 = tpu.matmul %11, %12, %cst_12 {dimension_numbers = #tpu.dot_dimension_numbers<[1], [0], [0], [1], [0, 0, 1, 1], [], []>} : vector<2x32xf32>, vector<32x32xf32>, vector<2x32xf32> -> vector<2x32xf32>
    %14 = vector.extract_strided_slice %5 {offsets = [0, 32], sizes = [2, 32], strides = [1, 1]} : vector<2x96xf32> to vector<2x32xf32>
    %15 = arith.addf %13, %14 : vector<2x32xf32>
    %16 = math.tanh %15 : vector<2x32xf32>
    %c0_13 = arith.constant 0 : index
    %c0_14 = arith.constant 0 : index
    %17 = vector.load %arg7[%c0_13, %c0_14] : memref<32x32xf32, #tpu.memory_space<vmem>>, vector<32x32xf32>
    %cst_15 = arith.constant dense<0.000000e+00> : vector<2x32xf32>
    %18 = tpu.matmul %16, %17, %cst_15 {dimension_numbers = #tpu.dot_dimension_numbers<[1], [0], [0], [1], [0, 0, 1, 1], [], []>} : vector<2x32xf32>, vector<32x32xf32>, vector<2x32xf32> -> vector<2x32xf32>
    %19 = vector.extract_strided_slice %5 {offsets = [0, 64], sizes = [2, 32], strides = [1, 1]} : vector<2x96xf32> to vector<2x32xf32>
    %20 = arith.addf %18, %19 : vector<2x32xf32>
    %21 = math.tanh %20 : vector<2x32xf32>
    %22 = tpu.concatenate %11, %16, %21 in 1 : vector<2x32xf32>, vector<2x32xf32>, vector<2x32xf32> -> vector<2x96xf32>
    %c0_16 = arith.constant 0 : index
    %c0_17 = arith.constant 0 : index
    %23 = vector.load %arg4[%c0_16, %c0_17] : memref<96x96xf32, #tpu.memory_space<vmem>>, vector<96x96xf32>
    %cst_18 = arith.constant dense<0.000000e+00> : vector<2x96xf32>
    %24 = tpu.matmul %22, %23, %cst_18 {dimension_numbers = #tpu.dot_dimension_numbers<[1], [0], [0], [1], [0, 0, 1, 1], [], []>} : vector<2x96xf32>, vector<96x96xf32>, vector<2x96xf32> -> vector<2x96xf32>
    %c0_19 = arith.constant 0 : index
    %c0_20 = arith.constant 0 : index
    %25 = vector.load %arg8[%c0_19, %c0_20] : memref<2x96xf32, #tpu.memory_space<vmem>>, vector<2x96xf32>
    tpu.vector_store %arg8[%c0_19, %c0_20], %24 {strides = array<i32>} : memref<2x96xf32, #tpu.memory_space<vmem>>, vector<2x96xf32>,
    return
  }
}

</mosaic_0001>

<llo_original>
// kernel: multilayer_rnn_cell.1
$region0: #{multilayer_rnn_cell.1}
  #allocation0 [shape = 'u32[]', space=smem, size = 0x4, offset = 0x4, fixed_abs, tag = 'smem constant byte address 0x4 - core index']
  #allocation1 [shape = 'u32[144,128]{1,0:T(1,128)}', space=vmem, size = 0x12000, scoped, tag = 'internal scratch']
  %s0 = inlined_call_operand.hbm [shape: f32[2,16], index: 0, kind: input, shape index: {}]
  %s1 = inlined_call_operand.vmem [shape: f32[2,96], index: 1, kind: input, shape index: {}]
  %s2 = inlined_call_operand.vmem [shape: f32[96,96], index: 2, kind: input, shape index: {}]
  %s3 = inlined_call_operand.vmem [shape: f32[1,96], index: 3, kind: input, shape index: {}]
  %s4 = inlined_call_operand.hbm [shape: f32[96,96], index: 4, kind: input, shape index: {}]
  %s5 = inlined_call_operand.vmem [shape: f32[16,32], index: 5, kind: input, shape index: {}]
  %s6 = inlined_call_operand.vmem [shape: f32[32,32], index: 6, kind: input, shape index: {}]
  %s7 = inlined_call_operand.hbm [shape: f32[32,32], index: 7, kind: input, shape index: {}]
  %s8 = inlined_call_operand.vmem [shape: f32[2,96], index: 8, kind: output, shape index: {}]
  %s9 = sld [smem:[#allocation0]]
  $region54: #{multilayer_rnn_cell.1} parent=0
    _
  %s11 = ssub.s32 1, %s9
  %s12 = scalar_select 0, %s11, %s9
  $region1: #{multilayer_rnn_cell.1} parent=0
    #allocation2 [shape = 'u8[1024]{0}', space=vmem, size = 0x400, scoped, tag = 'input window, operand 0, single buffered']
    #allocation3 [shape = 's32[1]{0}', space=sflag, size = 0x4, scoped, tag = 'scoped memory for multilayer_rnn_cell.1']
    #allocation4 [shape = 'u8[49152]{0}', space=vmem, size = 0xc000, scoped, tag = 'input window, operand 4, single buffered']
    #allocation5 [shape = 's32[1]{0}', space=sflag, size = 0x4, scoped, tag = 'scoped memory for multilayer_rnn_cell.1']
    #allocation6 [shape = 'u8[16384]{0}', space=vmem, size = 0x4000, scoped, tag = 'input window, operand 7, single buffered']
    %13 = vsyncpa [#allocation3], 0
    %14 = vsyncpa [#allocation5], 0
    // Predicated region
    $region2: #{multilayer_rnn_cell.1} parent=1 // pred_check
      _
    $region3: #{multilayer_rnn_cell.1} parent=1 // pred_check_branch
      %16 = sbr.rel (0) target = $region5
    $region4: #{multilayer_rnn_cell.1} parent=1 // pred_region
      %s18 = ssub.s32 32, 32
      %19 = vsyncadd [#allocation3], %s18
      %s21 = sshll.u32 [#allocation2], 4
      %s22 = int_to_ptr.vmem [resolvable:$true] %s21
      %24 = dma.hbm_to_vmem [thread:$0]  %s0, 32, %s22, [#allocation3]
    $region5: #{multilayer_rnn_cell.1} parent=1 // pred_fallthru
      _
    // Predicated region
    $region6: #{multilayer_rnn_cell.1} parent=1 // pred_check
      _
    $region7: #{multilayer_rnn_cell.1} parent=1 // pred_check_branch
      %26 = sbr.rel (0) target = $region9
    $region8: #{multilayer_rnn_cell.1} parent=1 // pred_region
      _
    $region9: #{multilayer_rnn_cell.1} parent=1 // pred_fallthru
      _
    // Predicated region
    $region10: #{multilayer_rnn_cell.1} parent=1 // pred_check
      _
    $region11: #{multilayer_rnn_cell.1} parent=1 // pred_check_branch
      %28 = sbr.rel (0) target = $region13
    $region12: #{multilayer_rnn_cell.1} parent=1 // pred_region
      _
    $region13: #{multilayer_rnn_cell.1} parent=1 // pred_fallthru
      _
    // Predicated region
    $region14: #{multilayer_rnn_cell.1} parent=1 // pred_check
      _
    $region15: #{multilayer_rnn_cell.1} parent=1 // pred_check_branch
      %30 = sbr.rel (0) target = $region17
    $region16: #{multilayer_rnn_cell.1} parent=1 // pred_region
      _
    $region17: #{multilayer_rnn_cell.1} parent=1 // pred_fallthru
      _
    // Predicated region
    $region18: #{multilayer_rnn_cell.1} parent=1 // pred_check
      _
    $region19: #{multilayer_rnn_cell.1} parent=1 // pred_check_branch
      %32 = sbr.rel (0) target = $region21
    $region20: #{multilayer_rnn_cell.1} parent=1 // pred_region
      %s34 = ssub.s32 1536, 1536
      %35 = vsyncadd [#allocation5], %s34
      %s36 = sshll.u32 [#allocation4], 4
      %s37 = int_to_ptr.vmem [resolvable:$true] %s36
      %42 = dma.hbm_to_vmem [thread:$0]  %s4, 1536, %s37, [#allocation5], 128, 128, 8
    $region21: #{multilayer_rnn_cell.1} parent=1 // pred_fallthru
      _
    // Predicated region
    $region22: #{multilayer_rnn_cell.1} parent=1 // pred_check
      _
    $region23: #{multilayer_rnn_cell.1} parent=1 // pred_check_branch
      %44 = sbr.rel (0) target = $region25
    $region24: #{multilayer_rnn_cell.1} parent=1 // pred_region
      _
    $region25: #{multilayer_rnn_cell.1} parent=1 // pred_fallthru
      _
    // Predicated region
    $region26: #{multilayer_rnn_cell.1} parent=1 // pred_check
      _
    $region27: #{multilayer_rnn_cell.1} parent=1 // pred_check_branch
      %46 = sbr.rel (0) target = $region29
    $region28: #{multilayer_rnn_cell.1} parent=1 // pred_region
      _
    $region29: #{multilayer_rnn_cell.1} parent=1 // pred_fallthru
      _
    // Predicated region
    $region30: #{multilayer_rnn_cell.1} parent=1 // pred_check
      _
    $region31: #{multilayer_rnn_cell.1} parent=1 // pred_check_branch
      %48 = sbr.rel (0) target = $region33
    $region32: #{multilayer_rnn_cell.1} parent=1 // pred_region
      %s50 = ssub.s32 512, 512
      %51 = vsyncadd [#allocation5], %s50
      %s52 = sshll.u32 [#allocation6], 4
      %s53 = int_to_ptr.vmem [resolvable:$true] %s52
      %58 = dma.hbm_to_vmem [thread:$0]  %s7, 512, %s53, [#allocation5], 128, 128, 8
    $region33: #{multilayer_rnn_cell.1} parent=1 // pred_fallthru
      _
    // Predicated region
    $region34: #{multilayer_rnn_cell.1} parent=1 // pred_check
      _
    $region35: #{multilayer_rnn_cell.1} parent=1 // pred_check_branch
      %60 = sbr.rel (0) target = $region37
    $region36: #{multilayer_rnn_cell.1} parent=1 // pred_region
      %61 = dma.done [#allocation3], 32
    $region37: #{multilayer_rnn_cell.1} parent=1 // pred_fallthru
      _
    // Predicated region
    $region38: #{multilayer_rnn_cell.1} parent=1 // pred_check
      _
    $region39: #{multilayer_rnn_cell.1} parent=1 // pred_check_branch
      %63 = sbr.rel (0) target = $region41
    $region40: #{multilayer_rnn_cell.1} parent=1 // pred_region
      %64 = dma.done [#allocation5], 1536
    $region41: #{multilayer_rnn_cell.1} parent=1 // pred_fallthru
      _
    // Predicated region
    $region42: #{multilayer_rnn_cell.1} parent=1 // pred_check
      _
    $region43: #{multilayer_rnn_cell.1} parent=1 // pred_check_branch
      %66 = sbr.rel (0) target = $region45
    $region44: #{multilayer_rnn_cell.1} parent=1 // pred_region
      %67 = dma.done [#allocation5], 512
    $region45: #{multilayer_rnn_cell.1} parent=1 // pred_fallthru
      _
    %v68 = vld [vmem:[%s1] sm:$0x3]
    %v69 = vld [vmem:[%s2] sm:$0xff]
    %v70 = vld [vmem:[%s2 + $0x8] sm:$0xff]
    %v71 = vld [vmem:[%s2 + $0x10] sm:$0xff]
    %v72 = vld [vmem:[%s2 + $0x18] sm:$0xff]
    %v73 = vld [vmem:[%s2 + $0x20] sm:$0xff]
    %v74 = vld [vmem:[%s2 + $0x28] sm:$0xff]
    %v75 = vld [vmem:[%s2 + $0x30] sm:$0xff]
    %v76 = vld [vmem:[%s2 + $0x38] sm:$0xff]
    %v77 = vld [vmem:[%s2 + $0x40] sm:$0xff]
    %v78 = vld [vmem:[%s2 + $0x48] sm:$0xff]
    %v79 = vld [vmem:[%s2 + $0x50] sm:$0xff]
    %v80 = vld [vmem:[%s2 + $0x58] sm:$0xff]
    %v81 = vld [vmem:[%s3] sm:$0x1]
    %v83 = vlaneseq
    %v84 = vshrl.u32 %v83, 7
    %v85 = vsub.s32 0, %v84
    %v86 = vrot.slane %v81, %v85
    %vm88 = vcmask 785408
    %v90 = vsel %vm88, %v68, 0
    %92 = vmatprep.subr.mxu0 0.0
    %93 = vmatpush1.msra.mxu0 %v69
    %94 = vmatprep.subr.mxu0 0.0
    %95 = vmatpush1.msra.mxu0 %v70
    %96 = vmatprep.subr.mxu0 0.0
    %97 = vmatpush1.msra.mxu0 %v71
    %98 = vmatprep.subr.mxu0 0.0
    %99 = vmatpush1.msra.mxu0 %v72
    %100 = vmatprep.subr.mxu0 0.0
    %101 = vmatpush1.msra.mxu0 %v73
    %102 = vmatprep.subr.mxu0 0.0
    %103 = vmatpush1.msra.mxu0 %v74
    %104 = vmatprep.subr.mxu0 0.0
    %105 = vmatpush1.msra.mxu0 %v75
    %106 = vmatprep.subr.mxu0 0.0
    %107 = vmatpush1.msra.mxu0 %v76
    %108 = vmatprep.subr.mxu0 0.0
    %109 = vmatpush1.msra.mxu0 %v77
    %110 = vmatprep.subr.mxu0 0.0
    %111 = vmatpush1.msra.mxu0 %v78
    %112 = vmatprep.subr.mxu0 0.0
    %113 = vmatpush1.msra.mxu0 %v79
    %114 = vmatprep.subr.mxu0 0.0
    %115 = vmatpush1.msra.mxu0 %v80
    %116 = vmatprep.subr.mxu0 0.0
    %117 = vmatpush1.msra.mxu0 0.0
    %118 = vmatprep.subr.mxu0 0.0
    %119 = vmatpush1.msra.mxu0 0.0
    %120 = vmatprep.subr.mxu0 0.0
    %121 = vmatpush1.msra.mxu0 0.0
    %122 = vmatprep.subr.mxu0 0.0
    %123 = vmatpush1.msra.mxu0 0.0
    %124 = vmatprep.subr.mxu0 0.0
    %125 = vmatpush1.msra.mxu0 0.0
    %126 = vmatprep.subr.mxu0 0.0
    %127 = vmatpush1.msra.mxu0 0.0
    %128 = vmatprep.subr.mxu0 0.0
    %129 = vmatpush1.msra.mxu0 0.0
    %130 = vmatprep.subr.mxu0 0.0
    %131 = vmatpush1.msra.mxu0 0.0
    %132 = vmatprep.subr.mxu0 0.0
    %133 = vmatpush1.msra.mxu0 0.0
    %134 = vmatprep.subr.mxu0 0.0
    %135 = vmatpush1.msra.mxu0 0.0
    %136 = vmatprep.subr.mxu0 0.0
    %137 = vmatpush1.msra.mxu0 0.0
    %138 = vmatprep.subr.mxu0 0.0
    %139 = vmatpush1.msra.mxu0 0.0
    %140 = vmatprep.subr.mxu0 0.0
    %141 = vmatpush1.msra.mxu0 0.0
    %142 = vmatprep.subr.mxu0 0.0
    %143 = vmatpush1.msra.mxu0 0.0
    %144 = vmatprep.subr.mxu0 0.0
    %145 = vmatpush1.msra.mxu0 0.0
    %146 = vmatprep.subr.mxu0 0.0
    %147 = vmatpush1.msra.mxu0 0.0
    %148 = vmatprep.subr.mxu0 0.0
    %149 = vmatpush1.msra.mxu0 0.0
    %150 = vmatprep.subr.mxu0 0.0
    %151 = vmatpush1.msra.mxu0 0.0
    %152 = vmatprep.subr.mxu0 0.0
    %153 = vmatpush1.msra.mxu0 0.0
    %154 = vmatprep.subr.mxu0 0.0
    %155 = vmatpush1.msra.mxu0 0.0
    %156 = vmatprep.mubr.f32.mxu0 0.0
    %157 = vmatmul.mubr.f32.gmra.mrb[0].mxu0 %v90
    %v158 = vpop.f32.mrb[0].mxu0
    %v159 = vadd.f32 %v86, %v158
    %v160 = vpop.f32.mrb[0].mxu0
    %161 = vdwg.mxu0
    %v162 = vld [vmem:[#allocation2] sm:$0x3]
    %v163 = vld [vmem:[%s5] sm:$0xff]
    %v164 = vld [vmem:[%s5 + $0x8] sm:$0xff]
    %vm165 = vcmask 130048
    %v167 = vsel %vm165, %v162, 0
    %169 = vmatprep.subr.mxu0 0.0
    %170 = vmatpush1.msra.mxu0 %v163
    %171 = vmatprep.subr.mxu0 0.0
    %172 = vmatpush1.msra.mxu0 %v164
    %173 = vmatprep.subr.mxu0 0.0
    %174 = vmatpush1.msra.mxu0 0.0
    %175 = vmatprep.subr.mxu0 0.0
    %176 = vmatpush1.msra.mxu0 0.0
    %177 = vmatprep.subr.mxu0 0.0
    %178 = vmatpush1.msra.mxu0 0.0
    %179 = vmatprep.subr.mxu0 0.0
    %180 = vmatpush1.msra.mxu0 0.0
    %181 = vmatprep.subr.mxu0 0.0
    %182 = vmatpush1.msra.mxu0 0.0
    %183 = vmatprep.subr.mxu0 0.0
    %184 = vmatpush1.msra.mxu0 0.0
    %185 = vmatprep.subr.mxu0 0.0
    %186 = vmatpush1.msra.mxu0 0.0
    %187 = vmatprep.subr.mxu0 0.0
    %188 = vmatpush1.msra.mxu0 0.0
    %189 = vmatprep.subr.mxu0 0.0
    %190 = vmatpush1.msra.mxu0 0.0
    %191 = vmatprep.subr.mxu0 0.0
    %192 = vmatpush1.msra.mxu0 0.0
    %193 = vmatprep.subr.mxu0 0.0
    %194 = vmatpush1.msra.mxu0 0.0
    %195 = vmatprep.subr.mxu0 0.0
    %196 = vmatpush1.msra.mxu0 0.0
    %197 = vmatprep.subr.mxu0 0.0
    %198 = vmatpush1.msra.mxu0 0.0
    %199 = vmatprep.subr.mxu0 0.0
    %200 = vmatpush1.msra.mxu0 0.0
    %201 = vmatprep.subr.mxu0 0.0
    %202 = vmatpush1.msra.mxu0 0.0
    %203 = vmatprep.subr.mxu0 0.0
    %204 = vmatpush1.msra.mxu0 0.0
    %205 = vmatprep.subr.mxu0 0.0
    %206 = vmatpush1.msra.mxu0 0.0
    %207 = vmatprep.subr.mxu0 0.0
    %208 = vmatpush1.msra.mxu0 0.0
    %209 = vmatprep.subr.mxu0 0.0
    %210 = vmatpush1.msra.mxu0 0.0
    %211 = vmatprep.subr.mxu0 0.0
    %212 = vmatpush1.msra.mxu0 0.0
    %213 = vmatprep.subr.mxu0 0.0
    %214 = vmatpush1.msra.mxu0 0.0
    %215 = vmatprep.subr.mxu0 0.0
    %216 = vmatpush1.msra.mxu0 0.0
    %217 = vmatprep.subr.mxu0 0.0
    %218 = vmatpush1.msra.mxu0 0.0
    %219 = vmatprep.subr.mxu0 0.0
    %220 = vmatpush1.msra.mxu0 0.0
    %221 = vmatprep.subr.mxu0 0.0
    %222 = vmatpush1.msra.mxu0 0.0
    %223 = vmatprep.subr.mxu0 0.0
    %224 = vmatpush1.msra.mxu0 0.0
    %225 = vmatprep.subr.mxu0 0.0
    %226 = vmatpush1.msra.mxu0 0.0
    %227 = vmatprep.subr.mxu0 0.0
    %228 = vmatpush1.msra.mxu0 0.0
    %229 = vmatprep.subr.mxu0 0.0
    %230 = vmatpush1.msra.mxu0 0.0
    %231 = vmatprep.subr.mxu0 0.0
    %232 = vmatpush1.msra.mxu0 0.0
    %233 = vmatprep.mubr.f32.mxu0 0.0
    %234 = vmatmul.mubr.f32.gmra.mrb[0].mxu0 %v167
    %v235 = vpop.f32.mrb[0].mxu0
    %v236 = vadd.f32 %v159, %v235
    %v237 = vpop.f32.mrb[0].mxu0
    %238 = vdwg.mxu0
    %v239 = vtanh.pop %v236
    %v240 = vld [vmem:[%s6] sm:$0xff]
    %v241 = vld [vmem:[%s6 + $0x8] sm:$0xff]
    %v242 = vld [vmem:[%s6 + $0x10] sm:$0xff]
    %v243 = vld [vmem:[%s6 + $0x18] sm:$0xff]
    %245 = vrot.lane.b32.xlu0 %v159, 96
    %v246 = vpop.permute.xlu0 %245
    %vm248 = vcmask 261120
    %v250 = vsel %vm248, %v239, 0
    %252 = vmatprep.subr.mxu0 0.0
    %253 = vmatpush1.msra.mxu0 %v240
    %254 = vmatprep.subr.mxu0 0.0
    %255 = vmatpush1.msra.mxu0 %v241
    %256 = vmatprep.subr.mxu0 0.0
    %257 = vmatpush1.msra.mxu0 %v242
    %258 = vmatprep.subr.mxu0 0.0
    %259 = vmatpush1.msra.mxu0 %v243
    %260 = vmatprep.subr.mxu0 0.0
    %261 = vmatpush1.msra.mxu0 0.0
    %262 = vmatprep.subr.mxu0 0.0
    %263 = vmatpush1.msra.mxu0 0.0
    %264 = vmatprep.subr.mxu0 0.0
    %265 = vmatpush1.msra.mxu0 0.0
    %266 = vmatprep.subr.mxu0 0.0
    %267 = vmatpush1.msra.mxu0 0.0
    %268 = vmatprep.subr.mxu0 0.0
    %269 = vmatpush1.msra.mxu0 0.0
    %270 = vmatprep.subr.mxu0 0.0
    %271 = vmatpush1.msra.mxu0 0.0
    %272 = vmatprep.subr.mxu0 0.0
    %273 = vmatpush1.msra.mxu0 0.0
    %274 = vmatprep.subr.mxu0 0.0
    %275 = vmatpush1.msra.mxu0 0.0
    %276 = vmatprep.subr.mxu0 0.0
    %277 = vmatpush1.msra.mxu0 0.0
    %278 = vmatprep.subr.mxu0 0.0
    %279 = vmatpush1.msra.mxu0 0.0
    %280 = vmatprep.subr.mxu0 0.0
    %281 = vmatpush1.msra.mxu0 0.0
    %282 = vmatprep.subr.mxu0 0.0
    %283 = vmatpush1.msra.mxu0 0.0
    %284 = vmatprep.subr.mxu0 0.0
    %285 = vmatpush1.msra.mxu0 0.0
    %286 = vmatprep.subr.mxu0 0.0
    %287 = vmatpush1.msra.mxu0 0.0
    %288 = vmatprep.subr.mxu0 0.0
    %289 = vmatpush1.msra.mxu0 0.0
    %290 = vmatprep.subr.mxu0 0.0
    %291 = vmatpush1.msra.mxu0 0.0
    %292 = vmatprep.subr.mxu0 0.0
    %293 = vmatpush1.msra.mxu0 0.0
    %294 = vmatprep.subr.mxu0 0.0
    %295 = vmatpush1.msra.mxu0 0.0
    %296 = vmatprep.subr.mxu0 0.0
    %297 = vmatpush1.msra.mxu0 0.0
    %298 = vmatprep.subr.mxu0 0.0
    %299 = vmatpush1.msra.mxu0 0.0
    %300 = vmatprep.subr.mxu0 0.0
    %301 = vmatpush1.msra.mxu0 0.0
    %302 = vmatprep.subr.mxu0 0.0
    %303 = vmatpush1.msra.mxu0 0.0
    %304 = vmatprep.subr.mxu0 0.0
    %305 = vmatpush1.msra.mxu0 0.0
    %306 = vmatprep.subr.mxu0 0.0
    %307 = vmatpush1.msra.mxu0 0.0
    %308 = vmatprep.subr.mxu0 0.0
    %309 = vmatpush1.msra.mxu0 0.0
    %310 = vmatprep.subr.mxu0 0.0
    %311 = vmatpush1.msra.mxu0 0.0
    %312 = vmatprep.subr.mxu0 0.0
    %313 = vmatpush1.msra.mxu0 0.0
    %314 = vmatprep.subr.mxu0 0.0
    %315 = vmatpush1.msra.mxu0 0.0
    %316 = vmatprep.mubr.f32.mxu0 0.0
    %317 = vmatmul.mubr.f32.gmra.mrb[0].mxu0 %v250
    %v318 = vpop.f32.mrb[0].mxu0
    %v319 = vadd.f32 %v246, %v318
    %v320 = vpop.f32.mrb[0].mxu0
    %321 = vdwg.mxu0
    %v322 = vtanh.pop %v319
    %v323 = vld [vmem:[#allocation6] sm:$0xff]
    %v324 = vld [vmem:[#allocation6 + $0x8] sm:$0xff]
    %v325 = vld [vmem:[#allocation6 + $0x10] sm:$0xff]
    %v326 = vld [vmem:[#allocation6 + $0x18] sm:$0xff]
    %327 = vrot.lane.b32.xlu0 %v159, 64
    %v328 = vpop.permute.xlu0 %327
    %v331 = vsel %vm248, %v322, 0
    %333 = vmatprep.subr.mxu0 0.0
    %334 = vmatpush1.msra.mxu0 %v323
    %335 = vmatprep.subr.mxu0 0.0
    %336 = vmatpush1.msra.mxu0 %v324
    %337 = vmatprep.subr.mxu0 0.0
    %338 = vmatpush1.msra.mxu0 %v325
    %339 = vmatprep.subr.mxu0 0.0
    %340 = vmatpush1.msra.mxu0 %v326
    %341 = vmatprep.subr.mxu0 0.0
    %342 = vmatpush1.msra.mxu0 0.0
    %343 = vmatprep.subr.mxu0 0.0
    %344 = vmatpush1.msra.mxu0 0.0
    %345 = vmatprep.subr.mxu0 0.0
    %346 = vmatpush1.msra.mxu0 0.0
    %347 = vmatprep.subr.mxu0 0.0
    %348 = vmatpush1.msra.mxu0 0.0
    %349 = vmatprep.subr.mxu0 0.0
    %350 = vmatpush1.msra.mxu0 0.0
    %351 = vmatprep.subr.mxu0 0.0
    %352 = vmatpush1.msra.mxu0 0.0
    %353 = vmatprep.subr.mxu0 0.0
    %354 = vmatpush1.msra.mxu0 0.0
    %355 = vmatprep.subr.mxu0 0.0
    %356 = vmatpush1.msra.mxu0 0.0
    %357 = vmatprep.subr.mxu0 0.0
    %358 = vmatpush1.msra.mxu0 0.0
    %359 = vmatprep.subr.mxu0 0.0
    %360 = vmatpush1.msra.mxu0 0.0
    %361 = vmatprep.subr.mxu0 0.0
    %362 = vmatpush1.msra.mxu0 0.0
    %363 = vmatprep.subr.mxu0 0.0
    %364 = vmatpush1.msra.mxu0 0.0
    %365 = vmatprep.subr.mxu0 0.0
    %366 = vmatpush1.msra.mxu0 0.0
    %367 = vmatprep.subr.mxu0 0.0
    %368 = vmatpush1.msra.mxu0 0.0
    %369 = vmatprep.subr.mxu0 0.0
    %370 = vmatpush1.msra.mxu0 0.0
    %371 = vmatprep.subr.mxu0 0.0
    %372 = vmatpush1.msra.mxu0 0.0
    %373 = vmatprep.subr.mxu0 0.0
    %374 = vmatpush1.msra.mxu0 0.0
    %375 = vmatprep.subr.mxu0 0.0
    %376 = vmatpush1.msra.mxu0 0.0
    %377 = vmatprep.subr.mxu0 0.0
    %378 = vmatpush1.msra.mxu0 0.0
    %379 = vmatprep.subr.mxu0 0.0
    %380 = vmatpush1.msra.mxu0 0.0
    %381 = vmatprep.subr.mxu0 0.0
    %382 = vmatpush1.msra.mxu0 0.0
    %383 = vmatprep.subr.mxu0 0.0
    %384 = vmatpush1.msra.mxu0 0.0
    %385 = vmatprep.subr.mxu0 0.0
    %386 = vmatpush1.msra.mxu0 0.0
    %387 = vmatprep.subr.mxu0 0.0
    %388 = vmatpush1.msra.mxu0 0.0
    %389 = vmatprep.subr.mxu0 0.0
    %390 = vmatpush1.msra.mxu0 0.0
    %391 = vmatprep.subr.mxu0 0.0
    %392 = vmatpush1.msra.mxu0 0.0
    %393 = vmatprep.subr.mxu0 0.0
    %394 = vmatpush1.msra.mxu0 0.0
    %395 = vmatprep.subr.mxu0 0.0
    %396 = vmatpush1.msra.mxu0 0.0
    %397 = vmatprep.mubr.f32.mxu0 0.0
    %398 = vmatmul.mubr.f32.gmra.mrb[0].mxu0 %v331
    %v399 = vpop.f32.mrb[0].mxu0
    %v400 = vadd.f32 %v328, %v399
    %v401 = vpop.f32.mrb[0].mxu0
    %402 = vdwg.mxu0
    %v403 = vtanh.pop %v400
    %404 = vrot.lane.b32.xlu0 %v322, 32
    %v405 = vpop.permute.xlu0 %404
    %408 = vrot.lane.b32.xlu0 %v403, 64
    %v409 = vpop.permute.xlu0 %408
    %v411 = vsel %vm248, %v239, %v405
    %vm412 = vcmask 523264
    %v413 = vsel %vm412, %v411, %v409
    %v414 = vld [vmem:[#allocation4] sm:$0xff]
    %v415 = vld [vmem:[#allocation4 + $0x8] sm:$0xff]
    %v416 = vld [vmem:[#allocation4 + $0x10] sm:$0xff]
    %v417 = vld [vmem:[#allocation4 + $0x18] sm:$0xff]
    %v418 = vld [vmem:[#allocation4 + $0x20] sm:$0xff]
    %v419 = vld [vmem:[#allocation4 + $0x28] sm:$0xff]
    %v420 = vld [vmem:[#allocation4 + $0x30] sm:$0xff]
    %v421 = vld [vmem:[#allocation4 + $0x38] sm:$0xff]
    %v422 = vld [vmem:[#allocation4 + $0x40] sm:$0xff]
    %v423 = vld [vmem:[#allocation4 + $0x48] sm:$0xff]
    %v424 = vld [vmem:[#allocation4 + $0x50] sm:$0xff]
    %v425 = vld [vmem:[#allocation4 + $0x58] sm:$0xff]
    %v427 = vsel %vm88, %v413, 0
    %429 = vmatprep.subr.mxu0 0.0
    %430 = vmatpush1.msra.mxu0 %v414
    %431 = vmatprep.subr.mxu0 0.0
    %432 = vmatpush1.msra.mxu0 %v415
    %433 = vmatprep.subr.mxu0 0.0
    %434 = vmatpush1.msra.mxu0 %v416
    %435 = vmatprep.subr.mxu0 0.0
    %436 = vmatpush1.msra.mxu0 %v417
    %437 = vmatprep.subr.mxu0 0.0
    %438 = vmatpush1.msra.mxu0 %v418
    %439 = vmatprep.subr.mxu0 0.0
    %440 = vmatpush1.msra.mxu0 %v419
    %441 = vmatprep.subr.mxu0 0.0
    %442 = vmatpush1.msra.mxu0 %v420
    %443 = vmatprep.subr.mxu0 0.0
    %444 = vmatpush1.msra.mxu0 %v421
    %445 = vmatprep.subr.mxu0 0.0
    %446 = vmatpush1.msra.mxu0 %v422
    %447 = vmatprep.subr.mxu0 0.0
    %448 = vmatpush1.msra.mxu0 %v423
    %449 = vmatprep.subr.mxu0 0.0
    %450 = vmatpush1.msra.mxu0 %v424
    %451 = vmatprep.subr.mxu0 0.0
    %452 = vmatpush1.msra.mxu0 %v425
    %453 = vmatprep.subr.mxu0 0.0
    %454 = vmatpush1.msra.mxu0 0.0
    %455 = vmatprep.subr.mxu0 0.0
    %456 = vmatpush1.msra.mxu0 0.0
    %457 = vmatprep.subr.mxu0 0.0
    %458 = vmatpush1.msra.mxu0 0.0
    %459 = vmatprep.subr.mxu0 0.0
    %460 = vmatpush1.msra.mxu0 0.0
    %461 = vmatprep.subr.mxu0 0.0
    %462 = vmatpush1.msra.mxu0 0.0
    %463 = vmatprep.subr.mxu0 0.0
    %464 = vmatpush1.msra.mxu0 0.0
    %465 = vmatprep.subr.mxu0 0.0
    %466 = vmatpush1.msra.mxu0 0.0
    %467 = vmatprep.subr.mxu0 0.0
    %468 = vmatpush1.msra.mxu0 0.0
    %469 = vmatprep.subr.mxu0 0.0
    %470 = vmatpush1.msra.mxu0 0.0
    %471 = vmatprep.subr.mxu0 0.0
    %472 = vmatpush1.msra.mxu0 0.0
    %473 = vmatprep.subr.mxu0 0.0
    %474 = vmatpush1.msra.mxu0 0.0
    %475 = vmatprep.subr.mxu0 0.0
    %476 = vmatpush1.msra.mxu0 0.0
    %477 = vmatprep.subr.mxu0 0.0
    %478 = vmatpush1.msra.mxu0 0.0
    %479 = vmatprep.subr.mxu0 0.0
    %480 = vmatpush1.msra.mxu0 0.0
    %481 = vmatprep.subr.mxu0 0.0
    %482 = vmatpush1.msra.mxu0 0.0
    %483 = vmatprep.subr.mxu0 0.0
    %484 = vmatpush1.msra.mxu0 0.0
    %485 = vmatprep.subr.mxu0 0.0
    %486 = vmatpush1.msra.mxu0 0.0
    %487 = vmatprep.subr.mxu0 0.0
    %488 = vmatpush1.msra.mxu0 0.0
    %489 = vmatprep.subr.mxu0 0.0
    %490 = vmatpush1.msra.mxu0 0.0
    %491 = vmatprep.subr.mxu0 0.0
    %492 = vmatpush1.msra.mxu0 0.0
    %493 = vmatprep.mubr.f32.mxu0 0.0
    %494 = vmatmul.mubr.f32.gmra.mrb[0].mxu0 %v427
    %v495 = vpop.f32.mrb[0].mxu0
    %v496 = vadd.f32 0.0, %v495
    %v497 = vpop.f32.mrb[0].mxu0
    %498 = vdwg.mxu0
    %vm499 = vcmask 779264
    %500 = vst.msk [vmem:[%s8] sm:$0x3] %vm499, %v496
    // Predicated region
    $region46: #{multilayer_rnn_cell.1} parent=1 // pred_check
      _
    $region47: #{multilayer_rnn_cell.1} parent=1 // pred_check_branch
      %502 = sbr.rel (0) target = $region49
    $region48: #{multilayer_rnn_cell.1} parent=1 // pred_region
      _
    $region49: #{multilayer_rnn_cell.1} parent=1 // pred_fallthru
      _
    // Predicated region
    $region50: #{multilayer_rnn_cell.1} parent=1 // pred_check
      _
    $region51: #{multilayer_rnn_cell.1} parent=1 // pred_check_branch
      %504 = sbr.rel (0) target = $region53
    $region52: #{multilayer_rnn_cell.1} parent=1 // pred_region
      _
    $region53: #{multilayer_rnn_cell.1} parent=1 // pred_fallthru
      _
    %505 = vsyncpa [#allocation3], 1
    %506 = vsyncpa [#allocation5], 1

</llo_original>
